<compile_context>
chip_gen: v5e
topology: v5e:2x2
jax: 0.10.0
libtpu: 0.0.40
codegen_flags: <defaults>
</compile_context>

<pallas_src>
import functools

import jax
import jax.numpy as jnp
from jax import lax
from jax.experimental import pallas as pl
from jax.experimental.pallas import tpu as pltpu

C_IN = 3
C_OUT = 3
LANE = 128
MAX_ROW_TILE = 8192     # hard cap on the row tile (128-px rows, or image rows)
FUSED_MIN_W = 256       # use the native-layout fused path when rows are this lane-dense


def _cdiv(a, b):
    return -(-a // b)


def _vmem_capacity_bytes():
    try:
        info = pltpu.get_tpu_info()
        cap = getattr(info, "vmem_capacity_bytes", None)
        if cap:
            return int(cap)
    except Exception:
        pass
    return 64 * 1024 * 1024  # conservative fallback (v7x per-core VMEM)


def _vmem_limit_bytes(block_footprint, vmem_cap):
    want = max(32 * 1024 * 1024, block_footprint + 16 * 1024 * 1024)
    return int(min(vmem_cap - 4 * 1024 * 1024, want))


def _pick_row_tile(n_other_steps, total_rows, bytes_per_row, vmem_cap):
    """Largest row tile whose double-buffered blocks fit ~half of VMEM, a
    multiple of 16 (f32/bf16 safe); split so the grid has >= 2 parallel steps."""
    budget = min(vmem_cap, 128 * 1024 * 1024) // 2
    t = budget // max(bytes_per_row, 1)
    t = min(t, MAX_ROW_TILE)
    t = max((t // 16) * 16, 16)
    if t >= total_rows:
        t = total_rows                       # full extent (legal at any size)
    # v7x megacore: ensure >= 2 grid steps when the tensor is big enough to care.
    if n_other_steps * _cdiv(total_rows, t) < 2 and total_rows >= 32:
        t = ((_cdiv(total_rows, 2) + 15) // 16) * 16
    return t


# --------------------------------------------------------------------------
# Kernels
# --------------------------------------------------------------------------
def _conv1x1_flat_kernel(w_ref, b_ref, x_ref, o_ref):
    """Flattened path.  x_ref: (1, C_IN, rt, 128); o_ref: (1, C_OUT, rt, 128).
    w_ref: (9,) f32 SMEM row-major [co, ci]; b_ref: (3,) f32 SMEM."""
    x0 = x_ref[0, 0].astype(jnp.float32)
    x1 = x_ref[0, 1].astype(jnp.float32)
    x2 = x_ref[0, 2].astype(jnp.float32)
    for co in range(C_OUT):
        y = (w_ref[co * C_IN + 0] * x0
             + w_ref[co * C_IN + 1] * x1
             + w_ref[co * C_IN + 2] * x2
             + b_ref[co])
        o_ref[0, co] = y.astype(o_ref.dtype)


def _conv1x1_padded_kernel(w_ref, b_ref, x_ref, prev_ref, o_ref, *, hh):
    """Fused path: writes one (rt, W+2) tile of the final padded output.

    x_ref:    (1, C_IN, rt_in, W)   input rows [i*rt, i*rt + rt_in)
    prev_ref: (1, 1, C_IN, W+2)     input row i*rt - 1 (side columns zeroed)
    o_ref:    (1, C_OUT, rt, W+2)   output rows [i*rt, (i+1)*rt)

    Output row r, col c is bias on the 1-px border (r in {0, H+1} or c in
    {0, W+1}); otherwise sum_ci w[co, ci] * x[ci, r-1, c-1] + bias.
    """
    i = pl.program_id(1)
    rt = o_ref.shape[2]
    rt_in = x_ref.shape[2]
    wdim = x_ref.shape[3]
    wp2 = o_ref.shape[3]
    nrows = min(rt - 1, rt_in)          # rows of `core` landing inside this tile

    x0 = x_ref[0, 0].astype(jnp.float32)
    x1 = x_ref[0, 1].astype(jnp.float32)
    x2 = x_ref[0, 2].astype(jnp.float32)
    pv = prev_ref[0, 0].astype(jnp.float32)            # (C_IN, W+2)

    # core[j] feeds output row i*rt + j + 1; interior iff that row <= H.
    row = lax.broadcasted_iota(jnp.int32, (rt_in, 1), 0)
    is_interior_row = row <= (hh - 1 - i * rt)
    # output local row 0 (global row i*rt) is interior iff i > 0 and i*rt <= H.
    first_is_interior = jnp.logical_and(i > 0, i * rt <= hh)

    for co in range(C_OUT):
        w0 = w_ref[co * C_IN + 0]
        w1 = w_ref[co * C_IN + 1]
        w2 = w_ref[co * C_IN + 2]
        bco = b_ref[co]

        # 1) whole tile <- bias: side columns, top/bottom border rows, and any
        #    rows past H+1 (dropped by the partial-block writeback mask).
        o_ref[0, co] = jnp.full((rt, wp2), bco, jnp.float32).astype(o_ref.dtype)

        # 2) interior body: output local rows 1..nrows, columns 1..W.
        core = w0 * x0 + w1 * x1 + w2 * x2 + bco        # (rt_in, W)
        core = jnp.where(is_interior_row, core, bco)
        o_ref[0, co, 1:1 + nrows, 1:1 + wdim] = core[:nrows, :].astype(o_ref.dtype)

        # 3) output local row 0 comes from the previous block's last input row;
        #    its side columns are already bias because prev is zero-padded to W+2.
        @pl.when(first_is_interior)
        def _():
            fr = w0 * pv[0:1] + w1 * pv[1:2] + w2 * pv[2:3] + bco   # (1, W+2)
            o_ref[0, co, 0:1, :] = fr.astype(o_ref.dtype)


# --------------------------------------------------------------------------
# Forward wrapper
# --------------------------------------------------------------------------
def detnet2_forward(x_nchw, weight, bias, *, row_tile=None):
    """Conv2d(3, 3, kernel_size=1, padding=1): (N,3,H,W) -> (N,3,H+2,W+2)."""
    n, c, h, w = x_nchw.shape
    assert c == C_IN
    out_dtype = x_nchw.dtype
    itemsize = jnp.dtype(x_nchw.dtype).itemsize

    w_flat = weight.reshape(C_OUT * C_IN).astype(jnp.float32)   # (9,) [co, ci]
    b_vec = bias.reshape(C_OUT).astype(jnp.float32)             # (3,)
    smem_spec = pl.BlockSpec(memory_space=pltpu.MemorySpace.SMEM)

    vmem_cap = _vmem_capacity_bytes()
    p = h * w
    use_fused = (w >= FUSED_MIN_W) or (p % LANE != 0)

    if use_fused:
        # ---- native-layout path: kernel writes the final padded tensor ----
        hp2, wp2 = h + 2, w + 2
        if row_tile is None:
            bytes_per_row = (C_IN * w + C_OUT * wp2) * itemsize * 2   # dbl-buffered
            rt = _pick_row_tile(n, hp2, bytes_per_row, vmem_cap)
        else:
            rt = row_tile
        nb = _cdiv(hp2, rt)
        in_rows = rt if rt <= h else h
        in_max_blk = max(_cdiv(h, in_rows) - 1, 0)

        # One input row per row block ("previous row"), zero-padded to width
        # W+2 so its conv result already carries bias in the border columns.
        idx = jnp.clip(jnp.arange(nb, dtype=jnp.int32) * rt - 1, 0, h - 1)
        prev = jnp.take(x_nchw, idx, axis=2)                   # (N, C, nb, W) - tiny
        prev = jnp.transpose(prev, (0, 2, 1, 3))               # (N, nb, C, W)
        prev = jnp.pad(prev, ((0, 0), (0, 0), (0, 0), (1, 1)))  # (N, nb, C, W+2)

        footprint = 2 * (C_IN * in_rows * w + C_OUT * rt * wp2 + C_IN * wp2) * itemsize
        kernel = functools.partial(_conv1x1_padded_kernel, hh=h)
        return pl.pallas_call(
            kernel,
            out_shape=jax.ShapeDtypeStruct((n, C_OUT, hp2, wp2), out_dtype),
            grid=(n, nb),
            in_specs=[
                smem_spec,                                        # weights
                smem_spec,                                        # bias
                pl.BlockSpec((1, C_IN, in_rows, w),
                             lambda b, i: (b, 0, jnp.minimum(i, in_max_blk), 0)),
                pl.BlockSpec((1, 1, C_IN, wp2), lambda b, i: (b, i, 0, 0)),
            ],
            out_specs=pl.BlockSpec((1, C_OUT, rt, wp2), lambda b, i: (b, 0, i, 0)),
            compiler_params=pltpu.CompilerParams(
                dimension_semantics=("parallel", "parallel"),
                vmem_limit_bytes=_vmem_limit_bytes(footprint, vmem_cap),
            ),
        )(w_flat, b_vec, x_nchw, prev)

    # ---- flattened path (small W, 128-aligned pixel count): lane-dense slabs ----
    rows = p // LANE
    x_k = x_nchw.reshape(n, C_IN, rows, LANE)                   # free reshape
    if row_tile is None:
        bytes_per_row = (C_IN + C_OUT) * LANE * itemsize * 2
        rt = _pick_row_tile(n, rows, bytes_per_row, vmem_cap)
    else:
        rt = row_tile
    footprint = 2 * (C_IN + C_OUT) * rt * LANE * itemsize
    interior_k = pl.pallas_call(
        _conv1x1_flat_kernel,
        out_shape=jax.ShapeDtypeStruct((n, C_OUT, rows, LANE), out_dtype),
        grid=(n, _cdiv(rows, rt)),
        in_specs=[
            smem_spec,
            smem_spec,
            pl.BlockSpec((1, C_IN, rt, LANE), lambda b, i: (b, 0, i, 0)),
        ],
        out_specs=pl.BlockSpec((1, C_OUT, rt, LANE), lambda b, i: (b, 0, i, 0)),
        compiler_params=pltpu.CompilerParams(
            dimension_semantics=("parallel", "parallel"),
            vmem_limit_bytes=_vmem_limit_bytes(footprint, vmem_cap),
        ),
    )(w_flat, b_vec, x_k)

    interior = interior_k.reshape(n, C_OUT, h, w)
    # padding=1 on a 1x1 conv: the 1-px output border is exactly the bias.
    # Kept only for the small-W path; the fused path writes borders in-kernel.
    out = jnp.broadcast_to(b_vec.astype(out_dtype).reshape(1, C_OUT, 1, 1),
                           (n, C_OUT, h + 2, w + 2))
    out = lax.dynamic_update_slice(out, interior, (0, 0, 1, 1))
    return out


# --------------------------------------------------------------------------
# Demo / self-check
# --------------------------------------------------------------------------
def _reference(x, weight, bias):
    xp = jnp.pad(x.astype(jnp.float32), ((0, 0), (0, 0), (1, 1), (1, 1)))
    y = jnp.einsum("oc,nchw->nohw",
                   weight.reshape(C_OUT, C_IN).astype(jnp.float32), xp)
    return y + bias.reshape(1, C_OUT, 1, 1).astype(jnp.float32)


def init_params(key):
    kw, kb = jax.random.split(key)
    weight = jax.random.normal(kw, (C_OUT, C_IN, 1, 1), dtype=jnp.float32) * 0.1
    bias = jax.random.normal(kb, (C_OUT,), dtype=jnp.float32) * 0.1
    return weight, bias


if __name__ == "__main__":
    key = jax.random.PRNGKey(0)
    kx1, kx2, kp = jax.random.split(key, 3)
    weight, bias = init_params(kp)

    # 1) Small W -> flattened (rows, 128) path + bias-border epilogue.
    x1 = jax.random.normal(kx1, (2, 3, 16, 16), dtype=jnp.float32)
    out1 = jax.block_until_ready(jax.jit(detnet2_forward)(x1, weight, bias))
    assert out1.shape == (2, 3, 18, 18)
    assert jnp.allclose(out1, _reference(x1, weight, bias), atol=1e-5, rtol=1e-5)

    # 2) Wide rows -> fused path writing the padded output directly; a small
    #    forced row_tile exercises multi-block rows, the "previous row" feed,
    #    bottom-border masking and a partial last block.
    x2 = jax.random.normal(kx2, (1, 3, 35, 260), dtype=jnp.float32)
    fwd2 = jax.jit(functools.partial(detnet2_forward, row_tile=16))
    out2 = jax.block_until_ready(fwd2(x2, weight, bias))
    assert out2.shape == (1, 3, 37, 262)
    assert jnp.allclose(out2, _reference(x2, weight, bias), atol=1e-5, rtol=1e-5)

    print("KERNEL_OK")
</pallas_src>

<mosaic_0001>
module attributes {stable_mosaic.version = 11 : i64} {
  func.func @_conv1x1_flat_kernel(%arg0: i32, %arg1: i32, %arg2: memref<9xf32, #tpu.memory_space<smem>>, %arg3: memref<3xf32, #tpu.memory_space<smem>>, %arg4: memref<1x3x2x128xf32, #tpu.memory_space<vmem>>, %arg5: memref<1x3x2x128xf32, #tpu.memory_space<vmem>>) attributes {dimension_semantics = [#tpu.dimension_semantics<parallel>, #tpu.dimension_semantics<parallel>], iteration_bounds = array<i64: 2, 1>, scalar_prefetch = 0 : i64, scratch_operands = 0 : i64, tpu.core_type = #tpu.core_type<tc>, window_params = [{transform_indices = @transform_0, window_bounds = array<i64: 9>}, {transform_indices = @transform_1, window_bounds = array<i64: 3>}, {transform_indices = @transform_2, window_bounds = array<i64: 1, 3, 2, 128>}, {transform_indices = @transform_3, window_bounds = array<i64: 1, 3, 2, 128>}]} {
    %c0 = arith.constant 0 : index
    %c0_0 = arith.constant 0 : index
    %c0_1 = arith.constant 0 : index
    %c0_2 = arith.constant 0 : index
    %0 = vector.load %arg4[%c0, %c0_0, %c0_1, %c0_2] : memref<1x3x2x128xf32, #tpu.memory_space<vmem>>, vector<1x1x2x128xf32>
    %1 = vector.shape_cast %0 : vector<1x1x2x128xf32> to vector<2x128xf32>
    %c0_3 = arith.constant 0 : index
    %c1 = arith.constant 1 : index
    %c0_4 = arith.constant 0 : index
    %c0_5 = arith.constant 0 : index
    %2 = vector.load %arg4[%c0_3, %c1, %c0_4, %c0_5] : memref<1x3x2x128xf32, #tpu.memory_space<vmem>>, vector<1x1x2x128xf32>
    %3 = vector.shape_cast %2 : vector<1x1x2x128xf32> to vector<2x128xf32>
    %c0_6 = arith.constant 0 : index
    %c2 = arith.constant 2 : index
    %c0_7 = arith.constant 0 : index
    %c0_8 = arith.constant 0 : index
    %4 = vector.load %arg4[%c0_6, %c2, %c0_7, %c0_8] : memref<1x3x2x128xf32, #tpu.memory_space<vmem>>, vector<1x1x2x128xf32>
    %5 = vector.shape_cast %4 : vector<1x1x2x128xf32> to vector<2x128xf32>
    %c0_9 = arith.constant 0 : index
    %6 = memref.load %arg2[%c0_9] : memref<9xf32, #tpu.memory_space<smem>>
    %7 = vector.broadcast %6 : f32 to vector<2x128xf32>
    %8 = arith.mulf %7, %1 : vector<2x128xf32>
    %c1_10 = arith.constant 1 : index
    %9 = memref.load %arg2[%c1_10] : memref<9xf32, #tpu.memory_space<smem>>
    %10 = vector.broadcast %9 : f32 to vector<2x128xf32>
    %11 = arith.mulf %10, %3 : vector<2x128xf32>
    %12 = arith.addf %8, %11 : vector<2x128xf32>
    %c2_11 = arith.constant 2 : index
    %13 = memref.load %arg2[%c2_11] : memref<9xf32, #tpu.memory_space<smem>>
    %14 = vector.broadcast %13 : f32 to vector<2x128xf32>
    %15 = arith.mulf %14, %5 : vector<2x128xf32>
    %16 = arith.addf %12, %15 : vector<2x128xf32>
    %c0_12 = arith.constant 0 : index
    %17 = memref.load %arg3[%c0_12] : memref<3xf32, #tpu.memory_space<smem>>
    %18 = vector.broadcast %17 : f32 to vector<2x128xf32>
    %19 = arith.addf %16, %18 : vector<2x128xf32>
    %c0_13 = arith.constant 0 : index
    %c0_14 = arith.constant 0 : index
    %c0_15 = arith.constant 0 : index
    %c0_16 = arith.constant 0 : index
    %20 = vector.load %arg5[%c0_13, %c0_14, %c0_15, %c0_16] : memref<1x3x2x128xf32, #tpu.memory_space<vmem>>, vector<1x1x2x128xf32>
    %21 = vector.shape_cast %20 : vector<1x1x2x128xf32> to vector<2x128xf32>
    %22 = vector.shape_cast %19 : vector<2x128xf32> to vector<1x1x2x128xf32>
    tpu.vector_store %arg5[%c0_13, %c0_14, %c0_15, %c0_16], %22 {strides = array<i32>} : memref<1x3x2x128xf32, #tpu.memory_space<vmem>>, vector<1x1x2x128xf32>,
    %c3 = arith.constant 3 : index
    %23 = memref.load %arg2[%c3] : memref<9xf32, #tpu.memory_space<smem>>
    %24 = vector.broadcast %23 : f32 to vector<2x128xf32>
    %25 = arith.mulf %24, %1 : vector<2x128xf32>
    %c4 = arith.constant 4 : index
    %26 = memref.load %arg2[%c4] : memref<9xf32, #tpu.memory_space<smem>>
    %27 = vector.broadcast %26 : f32 to vector<2x128xf32>
    %28 = arith.mulf %27, %3 : vector<2x128xf32>
    %29 = arith.addf %25, %28 : vector<2x128xf32>
    %c5 = arith.constant 5 : index
    %30 = memref.load %arg2[%c5] : memref<9xf32, #tpu.memory_space<smem>>
    %31 = vector.broadcast %30 : f32 to vector<2x128xf32>
    %32 = arith.mulf %31, %5 : vector<2x128xf32>
    %33 = arith.addf %29, %32 : vector<2x128xf32>
    %c1_17 = arith.constant 1 : index
    %34 = memref.load %arg3[%c1_17] : memref<3xf32, #tpu.memory_space<smem>>
    %35 = vector.broadcast %34 : f32 to vector<2x128xf32>
    %36 = arith.addf %33, %35 : vector<2x128xf32>
    %c0_18 = arith.constant 0 : index
    %c1_19 = arith.constant 1 : index
    %c0_20 = arith.constant 0 : index
    %c0_21 = arith.constant 0 : index
    %37 = vector.load %arg5[%c0_18, %c1_19, %c0_20, %c0_21] : memref<1x3x2x128xf32, #tpu.memory_space<vmem>>, vector<1x1x2x128xf32>
    %38 = vector.shape_cast %37 : vector<1x1x2x128xf32> to vector<2x128xf32>
    %39 = vector.shape_cast %36 : vector<2x128xf32> to vector<1x1x2x128xf32>
    tpu.vector_store %arg5[%c0_18, %c1_19, %c0_20, %c0_21], %39 {strides = array<i32>} : memref<1x3x2x128xf32, #tpu.memory_space<vmem>>, vector<1x1x2x128xf32>,
    %c6 = arith.constant 6 : index
    %40 = memref.load %arg2[%c6] : memref<9xf32, #tpu.memory_space<smem>>
    %41 = vector.broadcast %40 : f32 to vector<2x128xf32>
    %42 = arith.mulf %41, %1 : vector<2x128xf32>
    %c7 = arith.constant 7 : index
    %43 = memref.load %arg2[%c7] : memref<9xf32, #tpu.memory_space<smem>>
    %44 = vector.broadcast %43 : f32 to vector<2x128xf32>
    %45 = arith.mulf %44, %3 : vector<2x128xf32>
    %46 = arith.addf %42, %45 : vector<2x128xf32>
    %c8 = arith.constant 8 : index
    %47 = memref.load %arg2[%c8] : memref<9xf32, #tpu.memory_space<smem>>
    %48 = vector.broadcast %47 : f32 to vector<2x128xf32>
    %49 = arith.mulf %48, %5 : vector<2x128xf32>
    %50 = arith.addf %46, %49 : vector<2x128xf32>
    %c2_22 = arith.constant 2 : index
    %51 = memref.load %arg3[%c2_22] : memref<3xf32, #tpu.memory_space<smem>>
    %52 = vector.broadcast %51 : f32 to vector<2x128xf32>
    %53 = arith.addf %50, %52 : vector<2x128xf32>
    %c0_23 = arith.constant 0 : index
    %c2_24 = arith.constant 2 : index
    %c0_25 = arith.constant 0 : index
    %c0_26 = arith.constant 0 : index
    %54 = vector.load %arg5[%c0_23, %c2_24, %c0_25, %c0_26] : memref<1x3x2x128xf32, #tpu.memory_space<vmem>>, vector<1x1x2x128xf32>
    %55 = vector.shape_cast %54 : vector<1x1x2x128xf32> to vector<2x128xf32>
    %56 = vector.shape_cast %53 : vector<2x128xf32> to vector<1x1x2x128xf32>
    tpu.vector_store %arg5[%c0_23, %c2_24, %c0_25, %c0_26], %56 {strides = array<i32>} : memref<1x3x2x128xf32, #tpu.memory_space<vmem>>, vector<1x1x2x128xf32>,
    return
  }
  func.func @transform_0(%arg0: i32, %arg1: i32) -> i32 {
    %c0_i32 = arith.constant 0 : i32
    %c0_i32_0 = arith.constant 0 : i32
    return %c0_i32 : i32
  }
  func.func @transform_1(%arg0: i32, %arg1: i32) -> i32 {
    %c0_i32 = arith.constant 0 : i32
    %c0_i32_0 = arith.constant 0 : i32
    return %c0_i32 : i32
  }
  func.func @transform_2(%arg0: i32, %arg1: i32) -> (i32, i32, i32, i32) {
    %c0_i32 = arith.constant 0 : i32
    %c0_i32_0 = arith.constant 0 : i32
    %c0_i32_1 = arith.constant 0 : i32
    return %arg0, %c0_i32, %arg1, %c0_i32_0 : i32, i32, i32, i32
  }
  func.func @transform_3(%arg0: i32, %arg1: i32) -> (i32, i32, i32, i32) {
    %c0_i32 = arith.constant 0 : i32
    %c0_i32_0 = arith.constant 0 : i32
    %c0_i32_1 = arith.constant 0 : i32
    return %arg0, %c0_i32, %arg1, %c0_i32_0 : i32, i32, i32, i32
  }
}

</mosaic_0001>

<llo_original>
// kernel: detnet2_forward.1
$region0: #{detnet2_forward.1}
  #allocation0 [shape = 'u32[]', space=smem, size = 0x4, offset = 0x4, fixed_abs, tag = 'smem constant byte address 0x4 - core index']
  #allocation1 [shape = 'u32[72,128]{1,0:T(1,128)}', space=vmem, size = 0x9000, scoped, tag = 'internal scratch']
  %s0 = inlined_call_operand.vmem [shape: f32[9], index: 0, kind: input, shape index: {}]
  %s1 = inlined_call_operand.vmem [shape: f32[3], index: 1, kind: input, shape index: {}]
  %s2 = inlined_call_operand.vmem [shape: f32[2,3,2,128], index: 2, kind: input, shape index: {}]
  %s3 = inlined_call_operand.vmem [shape: f32[2,3,2,128], index: 3, kind: output, shape index: {}]
  %s4 = sld [smem:[#allocation0]]
  $region53: #{detnet2_forward.1} parent=0
    _
  %s6 = ssub.s32 1, %s4
  %s7 = scalar_select 0, %s6, %s4
  $region1: #{detnet2_forward.1} parent=0
    #allocation2 [shape = 'u8[512]{0}', space=smem, size = 0x200, scoped, tag = 'input window, operand 0, single buffered']
    #allocation3 [shape = 's32[2]{0}', space=sflag, size = 0x8, scoped, tag = 'scoped memory for detnet2_forward.1']
    #allocation4 [shape = 'u8[512]{0}', space=smem, size = 0x200, scoped, tag = 'input window, operand 1, single buffered']
    #allocation5 [shape = 's32[1]{0}', space=sflag, size = 0x4, scoped, tag = 'scoped memory for detnet2_forward.1']
    %8 = vsyncpa [#allocation3], 0
    %9 = vsyncpa [#allocation5], 0
    loop: start=0, step=1, limit=4
    $region2: #{detnet2_forward.1} parent=1 // loop_pre_header
      _
    $region3: #{detnet2_forward.1} parent=1 // loop_header
      %s11 = sphi 0, %s15
      %p12 = scmp.ge.s32.totalorder %s11, 4
      %s18 = sphi 0, %s30
      %s19 = sphi 0, %s26
      %s20 = sphi 0, %s18
      %s21 = sphi 0, %s19
      %s22 = sphi 0, %s20
      %s23 = sphi 0, %s21
      %s31 = sphi 0, %s31
      %s33 = sphi 0, %s31
      %s34 = sphi 0, %s33
      %s48 = sphi 0, %s34
      %s52 = sphi 0, %s52
      %s54 = sphi 0, %s52
      %s55 = sphi 0, %s54
      %s69 = sphi 0, %s55
      %s77 = sphi 0, %s79
      %s80 = sphi 0, %s77
      %s81 = sphi 0, %s80
      %s97 = sphi 0, %s81
      %s105 = sphi 0, %s107
      %s108 = sphi 0, %s105
      %s109 = sphi 0, %s108
      %s125 = sphi 0, %s109
    $region4: #{detnet2_forward.1} parent=1 // loop_header_branch
      %14 = sbr.rel (%p12) target = $region8
    $region5: #{detnet2_forward.1} parent=1 // loop_body
      %s16 = ssub.s32 %s11, 1
      %s17 = ssub.s32 %s11, 2
      %s24 = sadd.s32 1, %s19
      %p25 = scmp.ge.s32.totalorder %s24, 1
      %s26 = scalar_select %p25, 0, %s24
      %s27 = sadd.s32 1, %s18
      %s28 = scalar_select %p25, %s27, %s18
      %p29 = scmp.ge.s32.totalorder %s28, 2
      %s30 = scalar_select %p29, 0, %s28
      %s32 = sadd.s32 %s31, 1
      %p35 = scmp.eq.s32.totalorder %s11, 1
      %p36 = scmp.ne.s32.totalorder %s31, %s33
      %p37 = scmp.eq.s32.totalorder %s11, 0
      %p38 = por %p36, %p37
      %p39 = scmp.ne.s32.totalorder %s31, %s33
      %p40 = scmp.eq.s32.totalorder %s16, 1
      %p41 = por %p39, %p40
      %p42 = scmp.ne.s32.totalorder %s33, %s34
      %p43 = scmp.eq.s32.totalorder %s16, 0
      %p44 = por %p42, %p43
      %p45 = scmp.ne.s32.totalorder %s33, %s34
      %p46 = scmp.eq.s32.totalorder %s17, 1
      %p47 = por %p45, %p46
      %p49 = scmp.ne.s32.totalorder %s34, %s48
      %p50 = scmp.eq.s32.totalorder %s17, 0
      %p51 = por %p49, %p50
      %s53 = sadd.s32 %s52, 1
      %p56 = scmp.eq.s32.totalorder %s11, 1
      %p57 = scmp.ne.s32.totalorder %s52, %s54
      %p58 = scmp.eq.s32.totalorder %s11, 0
      %p59 = por %p57, %p58
      %p60 = scmp.ne.s32.totalorder %s52, %s54
      %p61 = scmp.eq.s32.totalorder %s16, 1
      %p62 = por %p60, %p61
      %p63 = scmp.ne.s32.totalorder %s54, %s55
      %p64 = scmp.eq.s32.totalorder %s16, 0
      %p65 = por %p63, %p64
      %p66 = scmp.ne.s32.totalorder %s54, %s55
      %p67 = scmp.eq.s32.totalorder %s17, 1
      %p68 = por %p66, %p67
      %p70 = scmp.ne.s32.totalorder %s55, %s69
      %p71 = scmp.eq.s32.totalorder %s17, 0
      %p72 = por %p70, %p71
      %s73 = ssub.s32 %s18, %s30
      %s74 = ssub.s32 %s19, %s26
      %s75 = sor.u32 %s73, %s74
      %p76 = scmp.eq.s32.totalorder %s75, 0
      %s78 = sadd.s32 %s77, 1
      %s79 = scalar_select %p76, %s77, %s78
      %p82 = pneg %p76
      %p83 = scmp.eq.s32.totalorder %s11, 1
      %p84 = por %p82, %p83
      %p85 = scmp.ne.s32.totalorder %s77, %s80
      %p86 = scmp.eq.s32.totalorder %s11, 0
      %p87 = por %p85, %p86
      %p88 = scmp.ne.s32.totalorder %s77, %s80
      %p89 = scmp.eq.s32.totalorder %s16, 1
      %p90 = por %p88, %p89
      %p91 = scmp.ne.s32.totalorder %s80, %s81
      %p92 = scmp.eq.s32.totalorder %s16, 0
      %p93 = por %p91, %p92
      %p94 = scmp.ne.s32.totalorder %s80, %s81
      %p95 = scmp.eq.s32.totalorder %s17, 1
      %p96 = por %p94, %p95
      %p98 = scmp.ne.s32.totalorder %s81, %s97
      %p99 = scmp.eq.s32.totalorder %s17, 0
      %p100 = por %p98, %p99
      %s101 = ssub.s32 %s18, %s30
      %s102 = ssub.s32 %s19, %s26
      %s103 = sor.u32 %s101, %s102
      %p104 = scmp.eq.s32.totalorder %s103, 0
      %s106 = sadd.s32 %s105, 1
      %s107 = scalar_select %p104, %s105, %s106
      %p110 = pneg %p104
      %p111 = scmp.eq.s32.totalorder %s11, 1
      %p112 = por %p110, %p111
      %p113 = scmp.ne.s32.totalorder %s105, %s108
      %p114 = scmp.eq.s32.totalorder %s11, 0
      %p115 = por %p113, %p114
      %p116 = scmp.ne.s32.totalorder %s105, %s108
      %p117 = scmp.eq.s32.totalorder %s16, 1
      %p118 = por %p116, %p117
      %p119 = scmp.ne.s32.totalorder %s108, %s109
      %p120 = scmp.eq.s32.totalorder %s16, 0
      %p121 = por %p119, %p120
      %p122 = scmp.ne.s32.totalorder %s108, %s109
      %p123 = scmp.eq.s32.totalorder %s17, 1
      %p124 = por %p122, %p123
      %p126 = scmp.ne.s32.totalorder %s109, %s125
      %p127 = scmp.eq.s32.totalorder %s17, 0
      %p128 = por %p126, %p127
      %p129 = scmp.le.s32.totalorder 1, %s11
      %p130 = scmp.lt.s32.totalorder %s11, 3
      %p131 = pnand %p129, %p130
      %p132 = pneg %p131
      // Predicated region
      $region9: #{detnet2_forward.1} parent=5 // pred_check
        _
      $region10: #{detnet2_forward.1} parent=5 // pred_check_branch
        %134 = sbr.rel (%p131) target = $region12
      $region11: #{detnet2_forward.1} parent=5 // pred_region
        %s135 = ssub.s32 %s11, 1
        // Predicated region
        $region13: #{detnet2_forward.1} parent=11 // pred_check
          %p136 = pneg %p44
        $region14: #{detnet2_forward.1} parent=11 // pred_check_branch
          %138 = sbr.rel (%p136) target = $region16
        $region15: #{detnet2_forward.1} parent=11 // pred_region
          %140 = vsyncadd [#allocation3], 0
          %s142 = sshll.u32 %s0, 4
          %s143 = int_to_ptr.vmem [resolvable:$true] %s142
          %145 = dma.vmem_to_smem %s143, 16, [#allocation2], [#allocation3]
        $region16: #{detnet2_forward.1} parent=11 // pred_fallthru
          _
        // Predicated region
        $region17: #{detnet2_forward.1} parent=11 // pred_check
          %p146 = pneg %p65
        $region18: #{detnet2_forward.1} parent=11 // pred_check_branch
          %148 = sbr.rel (%p146) target = $region20
        $region19: #{detnet2_forward.1} parent=11 // pred_region
          %150 = vsyncadd [#allocation5], 0
          %s152 = sshll.u32 %s1, 4
          %s153 = int_to_ptr.vmem [resolvable:$true] %s152
          %155 = dma.vmem_to_smem %s153, 16, [#allocation4], [#allocation5]
        $region20: #{detnet2_forward.1} parent=11 // pred_fallthru
          _
      $region12: #{detnet2_forward.1} parent=5 // pred_fallthru
        _
      %p156 = scmp.lt.s32.totalorder %s11, 2
      // Predicated region
      $region21: #{detnet2_forward.1} parent=5 // pred_check
        %p157 = pneg %p156
      $region22: #{detnet2_forward.1} parent=5 // pred_check_branch
        %159 = sbr.rel (%p157) target = $region24
      $region23: #{detnet2_forward.1} parent=5 // pred_region
        // Predicated region
        $region25: #{detnet2_forward.1} parent=23 // pred_check
          %p160 = pneg %p87
        $region26: #{detnet2_forward.1} parent=23 // pred_check_branch
          %162 = sbr.rel (%p160) target = $region28
        $region27: #{detnet2_forward.1} parent=23 // pred_region
          %p163 = scmp.lt.s32.totalorder %s18, 1
          %s164 = scalar_select %p163, %s18, 1
          %p165 = scmp.lt.s32.totalorder %s19, 0
          %s166 = scalar_select %p165, %s19, 0
          %s167 = smul.addr %s164, 3
          %s168 = sadd.s32 %s166, %s167
          %s169 = smul.addr %s168, 2
          %s170 = scalar_lea.vmem %s2, %s169
        $region28: #{detnet2_forward.1} parent=23 // pred_fallthru
          _
      $region24: #{detnet2_forward.1} parent=5 // pred_fallthru
        _
      %p171 = scmp.le.s32.totalorder 1, %s11
      %p172 = scmp.lt.s32.totalorder %s11, 3
      %p173 = pnand %p171, %p172
      %p174 = pneg %p173
      // Predicated region
      $region29: #{detnet2_forward.1} parent=5 // pred_check
        _
      $region30: #{detnet2_forward.1} parent=5 // pred_check_branch
        %176 = sbr.rel (%p173) target = $region32
      $region31: #{detnet2_forward.1} parent=5 // pred_region
        %s177 = ssub.s32 %s11, 1
        // Predicated region
        $region33: #{detnet2_forward.1} parent=31 // pred_check
          %p178 = pneg %p44
        $region34: #{detnet2_forward.1} parent=31 // pred_check_branch
          %180 = sbr.rel (%p178) target = $region36
        $region35: #{detnet2_forward.1} parent=31 // pred_region
          %182 = dma.done [#allocation3], 16
        $region36: #{detnet2_forward.1} parent=31 // pred_fallthru
          _
        // Predicated region
        $region37: #{detnet2_forward.1} parent=31 // pred_check
          %p183 = pneg %p65
        $region38: #{detnet2_forward.1} parent=31 // pred_check_branch
          %185 = sbr.rel (%p183) target = $region40
        $region39: #{detnet2_forward.1} parent=31 // pred_region
          %187 = dma.done [#allocation5], 16
        $region40: #{detnet2_forward.1} parent=31 // pred_fallthru
          _
        %188 = sfence
        %p189 = pneg %p44
        %p190 = pneg %p41
        %p191 = pneg %p65
        %p192 = pneg %p62
        %p193 = scmp.lt.s32.totalorder %s20, 1
        %s194 = scalar_select %p193, %s20, 1
        %p195 = scmp.lt.s32.totalorder %s21, 0
        %s196 = scalar_select %p195, %s21, 0
        %s197 = smul.addr %s194, 3
        %s198 = sadd.s32 %s196, %s197
        %s199 = smul.addr %s198, 2
        %s200 = scalar_lea.vmem %s2, %s199
        %p201 = pneg %p93
        %p202 = pneg %p90
        %p203 = pneg %p121
        %p204 = pneg %p118
        %p205 = scmp.lt.s32.totalorder %s20, 1
        %s206 = scalar_select %p205, %s20, 1
        %p207 = scmp.lt.s32.totalorder %s21, 0
        %s208 = scalar_select %p207, %s21, 0
        %s209 = smul.addr %s206, 3
        %s210 = sadd.s32 %s208, %s209
        %s211 = smul.addr %s210, 2
        %s212 = scalar_lea.vmem %s3, %s211
        %p213 = scmp.lt.s32.totalorder %s20, 1
        %s214 = scalar_select %p213, %s20, 1
        %p215 = scmp.lt.s32.totalorder %s21, 0
        %s216 = scalar_select %p215, %s21, 0
        %s217 = smul.addr %s214, 3
        %s218 = sadd.s32 %s216, %s217
        %s219 = smul.addr %s218, 2
        %s220 = scalar_lea.vmem %s2, %s219
        %p221 = scmp.lt.s32.totalorder %s20, 1
        %s222 = scalar_select %p221, %s20, 1
        %p223 = scmp.lt.s32.totalorder %s21, 0
        %s224 = scalar_select %p223, %s21, 0
        %s225 = smul.addr %s222, 3
        %s226 = sadd.s32 %s224, %s225
        %s227 = smul.addr %s226, 2
        %s228 = scalar_lea.vmem %s3, %s227
        %v229 = vld [vmem:[%s220] sm:$0x3]
        %s230 = scalar_lea.vmem %s220, 2
        %v231 = vld [vmem:[%s230] sm:$0x3]
        %s232 = scalar_lea.vmem %s220, 4
        %v233 = vld [vmem:[%s232] sm:$0x3]
        %s234 = sld [smem:[#allocation2]]
        %v235 = vstv %s234
        %v236 = vmul.f32 %v235, %v229
        %s237 = sld [smem:[#allocation2 + $0x1]]
        %v238 = vstv %s237
        %v239 = vmul.f32 %v238, %v231
        %v240 = vadd.f32 %v236, %v239
        %s241 = sld [smem:[#allocation2 + $0x2]]
        %v242 = vstv %s241
        %v243 = vmul.f32 %v242, %v233
        %v244 = vadd.f32 %v240, %v243
        %s245 = sld [smem:[#allocation4]]
        %v246 = vstv %s245
        %v247 = vadd.f32 %v244, %v246
        %248 = vst [vmem:[%s228] sm:$0x3] %v247
        %s249 = sld [smem:[#allocation2 + $0x3]]
        %v250 = vstv %s249
        %v251 = vmul.f32 %v250, %v229
        %s252 = sld [smem:[#allocation2 + $0x4]]
        %v253 = vstv %s252
        %v254 = vmul.f32 %v253, %v231
        %v255 = vadd.f32 %v251, %v254
        %s256 = sld [smem:[#allocation2 + $0x5]]
        %v257 = vstv %s256
        %v258 = vmul.f32 %v257, %v233
        %v259 = vadd.f32 %v255, %v258
        %s260 = sld [smem:[#allocation4 + $0x1]]
        %v261 = vstv %s260
        %v262 = vadd.f32 %v259, %v261
        %s263 = scalar_lea.vmem %s228, 2
        %264 = vst [vmem:[%s263] sm:$0x3] %v262
        %s265 = sld [smem:[#allocation2 + $0x6]]
        %v266 = vstv %s265
        %v267 = vmul.f32 %v266, %v229
        %s268 = sld [smem:[#allocation2 + $0x7]]
        %v269 = vstv %s268
        %v270 = vmul.f32 %v269, %v231
        %v271 = vadd.f32 %v267, %v270
        %s272 = sld [smem:[#allocation2 + $0x8]]
        %v273 = vstv %s272
        %v274 = vmul.f32 %v273, %v233
        %v275 = vadd.f32 %v271, %v274
        %s276 = sld [smem:[#allocation4 + $0x2]]
        %v277 = vstv %s276
        %v278 = vadd.f32 %v275, %v277
        %s279 = scalar_lea.vmem %s228, 4
        %280 = vst [vmem:[%s279] sm:$0x3] %v278
        %p281 = scmp.lt.s32.totalorder %s20, 1
        %s282 = scalar_select %p281, %s20, 1
        %p283 = scmp.lt.s32.totalorder %s21, 0
        %s284 = scalar_select %p283, %s21, 0
        %s285 = smul.addr %s282, 3
        %s286 = sadd.s32 %s284, %s285
        %s287 = smul.addr %s286, 2
        %s288 = scalar_lea.vmem %s3, %s287
        // Predicated region
        $region41: #{detnet2_forward.1} parent=31 // pred_check
          %p289 = pneg %p118
        $region42: #{detnet2_forward.1} parent=31 // pred_check_branch
          %291 = sbr.rel (%p289) target = $region44
        $region43: #{detnet2_forward.1} parent=31 // pred_region
          _
        $region44: #{detnet2_forward.1} parent=31 // pred_fallthru
          _
      $region32: #{detnet2_forward.1} parent=5 // pred_fallthru
        _
      %p292 = scmp.le.s32.totalorder 2, %s11
      // Predicated region
      $region45: #{detnet2_forward.1} parent=5 // pred_check
        %p293 = pneg %p292
      $region46: #{detnet2_forward.1} parent=5 // pred_check_branch
        %295 = sbr.rel (%p293) target = $region48
      $region47: #{detnet2_forward.1} parent=5 // pred_region
        %s296 = ssub.s32 %s11, 2
        // Predicated region
        $region49: #{detnet2_forward.1} parent=47 // pred_check
          %p297 = pneg %p124
        $region50: #{detnet2_forward.1} parent=47 // pred_check_branch
          %299 = sbr.rel (%p297) target = $region52
        $region51: #{detnet2_forward.1} parent=47 // pred_region
          %p300 = scmp.lt.s32.totalorder %s22, 1
          %s301 = scalar_select %p300, %s22, 1
          %p302 = scmp.lt.s32.totalorder %s23, 0
          %s303 = scalar_select %p302, %s23, 0
          %s304 = smul.addr %s301, 3
          %s305 = sadd.s32 %s303, %s304
          %s306 = smul.addr %s305, 2
          %s307 = scalar_lea.vmem %s3, %s306
        $region52: #{detnet2_forward.1} parent=47 // pred_fallthru
          _
      $region48: #{detnet2_forward.1} parent=5 // pred_fallthru
        _
    $region6: #{detnet2_forward.1} parent=1 // loop_footer
      %s15 = sadd.s32 1, %s11
    $region7: #{detnet2_forward.1} parent=1 // loop_footer_branch
      %10 = sbr.rel target = $region3
    $region8: #{detnet2_forward.1} parent=1 // loop_exit
      _
    %308 = vsyncpa [#allocation3], 1
    %s309 = scalar_lea.sflag [#allocation3], 1
    %310 = vsyncpa %s309, 1
    %311 = vsyncpa [#allocation5], 1

</llo_original>
